<compile_context>
chip_gen: v7x
topology: tpu7x:2x2x1
jax: 0.10.0
libtpu: 0.0.40
codegen_flags: <defaults>
</compile_context>

<pallas_src>
import functools

import jax
import jax.numpy as jnp
from jax.experimental import pallas as pl
from jax.experimental.pallas import tpu as pltpu


def _round_up(x, m):
    return ((x + m - 1) // m) * m


def _mean_variance_loss_kernel(x_ref, t_ref, out_ref, *,
                               start_age, num_classes, tile_n, n_valid):
    """One grid step over a (C, TILE_N) slab of transposed logits.

    Writes this tile's partial [sum(mse), sum(variance)] into lanes 0/1 of its
    (1, 1, 128) output block; the wrapper reduces over tiles and applies the
    1/N and lambda scaling.
    """
    x = x_ref[...]                                   # (C, TILE_N) f32
    t = t_ref[...]                                   # (1, TILE_N) f32 targets

    # Numerically stable softmax along the class (sublane) axis.
    x_max = jnp.max(x, axis=0, keepdims=True)        # (1, TILE_N)
    e = jnp.exp(x - x_max)                           # (C, TILE_N)
    sum_e = jnp.sum(e, axis=0, keepdims=True)        # (1, TILE_N)
    # NOTE: pl.reciprocal(..., approx=True) moves this to the EUP but was not
    # validated against the 1e-5 reference tolerance -> keep exact.
    p = e * pl.reciprocal(sum_e, approx=False)       # (C, TILE_N)

    # Ages generated in-kernel (no extra input / DMA).  Centered about the
    # midpoint a0 so that var = E[ac^2] - mean_c^2 has little cancellation
    # while skipping the tile-wide (a - mean)^2 pass.
    half_span = (num_classes - 1) / 2.0
    a0 = start_age + half_span
    ac = (jax.lax.broadcasted_iota(jnp.int32, (num_classes, 1), 0)
          .astype(jnp.float32) - half_span)          # (C, 1), centered ages

    mean_c = jnp.sum(p * ac, axis=0, keepdims=True)          # (1, TILE_N)
    ex2_c = jnp.sum(p * (ac * ac), axis=0, keepdims=True)    # (1, TILE_N)
    variance = ex2_c - mean_c * mean_c                       # (1, TILE_N)

    diff = (mean_c + a0) - t                                 # (1, TILE_N)
    mse = diff * diff * pl.reciprocal(variance, approx=False)

    # Mask out padded batch columns (only present when N % TILE_N != 0).
    if n_valid % tile_n != 0:
        col = (pl.program_id(0) * tile_n
               + jax.lax.broadcasted_iota(jnp.int32, (1, tile_n), 1))
        valid = col < n_valid
        mse = jnp.where(valid, mse, 0.0)
        variance = jnp.where(valid, variance, 0.0)

    mse_sum = jnp.sum(mse, axis=1, keepdims=True)            # (1, 1)
    var_sum = jnp.sum(variance, axis=1, keepdims=True)       # (1, 1)

    # Fuse both partial sums into one lane-aligned row: lane0=mse, lane1=var.
    lane = jax.lax.broadcasted_iota(jnp.int32, (1, 128), 1)
    row = jnp.where(lane == 0, mse_sum,
                    jnp.where(lane == 1, var_sum, 0.0))      # (1, 128)
    out_ref[0] = row


def mean_variance_loss2(logits, target, *, lambda_1, lambda_2,
                        start_age, end_age, tile_n=2048):
    """JAX/Pallas equivalent of MeanVarianceLoss2.forward.

    logits: (N, C) with C == end_age - start_age + 1
    target: (N,) numeric (cast to float32, matching the torch code)
    returns: (lambda_1 * mean_loss, lambda_2 * variance_loss) as scalars

    tile_n: batch columns per grid step (multiple of 128). Default 2048 is a
    good fit for v6e/v7x; use ~1024 on v5e (smaller scoped VMEM).
    """
    n, c = logits.shape
    assert c == end_age - start_age + 1, "class dim must match age range"

    # Lane-dense layout: batch N on lanes, classes on sublanes.
    tile_n = min(tile_n, _round_up(n, 128))
    num_tiles = pl.cdiv(n, tile_n)
    n_pad = num_tiles * tile_n

    xt = jnp.transpose(logits.astype(jnp.float32))           # (C, N)
    t = target.astype(jnp.float32).reshape(1, n)              # (1, N)
    if n_pad != n:
        xt = jnp.pad(xt, ((0, 0), (0, n_pad - n)))
        t = jnp.pad(t, ((0, 0), (0, n_pad - n)))

    kernel = functools.partial(
        _mean_variance_loss_kernel,
        start_age=float(start_age), num_classes=c,
        tile_n=tile_n, n_valid=n)

    partial = pl.pallas_call(
        kernel,
        out_shape=jax.ShapeDtypeStruct((num_tiles, 1, 128), jnp.float32),
        grid_spec=pltpu.PrefetchScalarGridSpec(
            num_scalar_prefetch=0,
            grid=(num_tiles,),
            in_specs=[
                pl.BlockSpec((c, tile_n), lambda i: (0, i)),   # logits^T tile
                pl.BlockSpec((1, tile_n), lambda i: (0, i)),   # target row
            ],
            out_specs=pl.BlockSpec((1, 1, 128), lambda i: (i, 0, 0)),
        ),
        compiler_params=pltpu.CompilerParams(
            dimension_semantics=("parallel",),                # megacore-friendly
            vmem_limit_bytes=32 * 1024 * 1024,
        ),
    )(xt, t)

    # Tiny final reduction over per-tile partial sums, then scale.
    sums = jnp.sum(partial[:, 0, :2], axis=0)                  # (2,)
    mean_loss = lambda_1 * sums[0] / (2.0 * n)
    variance_loss = lambda_2 * sums[1] / n
    return mean_loss, variance_loss


def _reference(logits, target, *, lambda_1, lambda_2, start_age, end_age):
    """Pure-JAX reference mirroring the PyTorch module."""
    p = jax.nn.softmax(logits.astype(jnp.float32), axis=1)
    a = jnp.arange(start_age, end_age + 1, dtype=jnp.float32)
    mean = jnp.sum(p * a, axis=1)
    b = (a[None, :] - mean[:, None]) ** 2
    variance = jnp.sum(p * b, axis=1)
    mse = (mean - target.astype(jnp.float32)) ** 2 / variance
    return lambda_1 * (jnp.mean(mse) / 2.0), lambda_2 * jnp.mean(variance)


if __name__ == "__main__":
    # Loss "parameters" (module __init__ args).
    lambda_1 = 0.2
    lambda_2 = 0.05
    start_age = 0
    end_age = 31                   # -> C = 32 classes
    c = end_age - start_age + 1

    key = jax.random.PRNGKey(0)

    # Case 1: tiny batch (single tile, padded lanes masked in-kernel).
    # Case 2: multi-tile with ragged tail (exercises tiling + partial sums).
    for n, tile in ((8, 2048), (300, 128)):
        key, k_x, k_t = jax.random.split(key, 3)
        logits = jax.random.normal(k_x, (n, c), dtype=jnp.float32)
        target = jax.random.randint(k_t, (n,), start_age, end_age + 1,
                                    dtype=jnp.int32)

        m_loss, v_loss = mean_variance_loss2(
            logits, target,
            lambda_1=lambda_1, lambda_2=lambda_2,
            start_age=start_age, end_age=end_age, tile_n=tile)
        jax.block_until_ready((m_loss, v_loss))

        ref_m, ref_v = _reference(
            logits, target,
            lambda_1=lambda_1, lambda_2=lambda_2,
            start_age=start_age, end_age=end_age)

        assert jnp.allclose(m_loss, ref_m, rtol=1e-4, atol=1e-5), \
            (n, float(m_loss), float(ref_m))
        assert jnp.allclose(v_loss, ref_v, rtol=1e-4, atol=1e-5), \
            (n, float(v_loss), float(ref_v))

    print("KERNEL_OK")
</pallas_src>

<mosaic_0001>
module attributes {stable_mosaic.version = 11 : i64} {
  func.func @_mean_variance_loss_kernel(%arg0: i32, %arg1: memref<32x128xf32, #tpu.memory_space<vmem>>, %arg2: memref<1x128xf32, #tpu.memory_space<vmem>>, %arg3: memref<1x1x128xf32, #tpu.memory_space<vmem>>) attributes {dimension_semantics = [#tpu.dimension_semantics<parallel>], iteration_bounds = array<i64: 1>, scalar_prefetch = 0 : i64, scratch_operands = 0 : i64, tpu.core_type = #tpu.core_type<tc>, window_params = [{transform_indices = @transform_0, window_bounds = array<i64: 32, 128>}, {transform_indices = @transform_1, window_bounds = array<i64: 1, 128>}, {transform_indices = @transform_2, window_bounds = array<i64: 1, 1, 128>}]} {
    %c0 = arith.constant 0 : index
    %c0_0 = arith.constant 0 : index
    %0 = vector.load %arg1[%c0, %c0_0] : memref<32x128xf32, #tpu.memory_space<vmem>>, vector<32x128xf32>
    %c0_1 = arith.constant 0 : index
    %c0_2 = arith.constant 0 : index
    %1 = vector.load %arg2[%c0_1, %c0_2] : memref<1x128xf32, #tpu.memory_space<vmem>>, vector<1x128xf32>
    %cst = arith.constant dense<0xFF800000> : vector<128xf32>
    %2 = vector.multi_reduction <maximumf>, %0, %cst [0] : vector<32x128xf32> to vector<128xf32>
    %3 = vector.shape_cast %2 : vector<128xf32> to vector<1x128xf32>
    %4 = vector.broadcast %3 : vector<1x128xf32> to vector<32x128xf32>
    %5 = arith.subf %0, %4 : vector<32x128xf32>
    %6 = math.exp %5 : vector<32x128xf32>
    %cst_3 = arith.constant dense<0.000000e+00> : vector<128xf32>
    %7 = vector.multi_reduction <add>, %6, %cst_3 [0] : vector<32x128xf32> to vector<128xf32>
    %8 = vector.shape_cast %7 : vector<128xf32> to vector<1x128xf32>
    %9 = tpu.reciprocal %8 : vector<1x128xf32> -> vector<1x128xf32>
    %10 = vector.broadcast %9 : vector<1x128xf32> to vector<32x128xf32>
    %11 = arith.mulf %6, %10 : vector<32x128xf32>
    %12 = tpu.iota {dimensions = array<i32: 0>} : vector<32x1xi32>
    %13 = arith.sitofp %12 : vector<32x1xi32> to vector<32x1xf32>
    %cst_4 = arith.constant 1.550000e+01 : f32
    %14 = vector.broadcast %cst_4 : f32 to vector<32x1xf32>
    %15 = arith.subf %13, %14 : vector<32x1xf32>
    %16 = vector.broadcast %15 : vector<32x1xf32> to vector<32x128xf32>
    %17 = arith.mulf %11, %16 : vector<32x128xf32>
    %cst_5 = arith.constant dense<0.000000e+00> : vector<128xf32>
    %18 = vector.multi_reduction <add>, %17, %cst_5 [0] : vector<32x128xf32> to vector<128xf32>
    %19 = vector.shape_cast %18 : vector<128xf32> to vector<1x128xf32>
    %20 = arith.mulf %15, %15 : vector<32x1xf32>
    %21 = vector.broadcast %20 : vector<32x1xf32> to vector<32x128xf32>
    %22 = arith.mulf %11, %21 : vector<32x128xf32>
    %cst_6 = arith.constant dense<0.000000e+00> : vector<128xf32>
    %23 = vector.multi_reduction <add>, %22, %cst_6 [0] : vector<32x128xf32> to vector<128xf32>
    %24 = vector.shape_cast %23 : vector<128xf32> to vector<1x128xf32>
    %25 = arith.mulf %19, %19 : vector<1x128xf32>
    %26 = arith.subf %24, %25 : vector<1x128xf32>
    %cst_7 = arith.constant 1.550000e+01 : f32
    %27 = vector.broadcast %cst_7 : f32 to vector<1x128xf32>
    %28 = arith.addf %19, %27 : vector<1x128xf32>
    %29 = arith.subf %28, %1 : vector<1x128xf32>
    %30 = arith.mulf %29, %29 : vector<1x128xf32>
    %31 = tpu.reciprocal %26 : vector<1x128xf32> -> vector<1x128xf32>
    %32 = arith.mulf %30, %31 : vector<1x128xf32>
    %c128_i32 = arith.constant 128 : i32
    %33 = arith.muli %arg0, %c128_i32 : i32
    %34 = tpu.iota {dimensions = array<i32: 1>} : vector<1x128xi32>
    %35 = vector.broadcast %33 : i32 to vector<1x128xi32>
    %36 = arith.addi %35, %34 : vector<1x128xi32>
    %c8_i32 = arith.constant 8 : i32
    %37 = vector.broadcast %c8_i32 : i32 to vector<1x128xi32>
    %38 = arith.cmpi slt, %36, %37 : vector<1x128xi32>
    %cst_8 = arith.constant 0.000000e+00 : f32
    %39 = vector.broadcast %cst_8 : f32 to vector<1x128xf32>
    %40 = arith.select %38, %32, %39 : vector<1x128xi1>, vector<1x128xf32>
    %cst_9 = arith.constant 0.000000e+00 : f32
    %41 = vector.broadcast %cst_9 : f32 to vector<1x128xf32>
    %42 = arith.select %38, %26, %41 : vector<1x128xi1>, vector<1x128xf32>
    %cst_10 = arith.constant dense<0.000000e+00> : vector<1xf32>
    %43 = vector.multi_reduction <add>, %40, %cst_10 [1] : vector<1x128xf32> to vector<1xf32>
    %44 = vector.shape_cast %43 : vector<1xf32> to vector<1x1xf32>
    %cst_11 = arith.constant dense<0.000000e+00> : vector<1xf32>
    %45 = vector.multi_reduction <add>, %42, %cst_11 [1] : vector<1x128xf32> to vector<1xf32>
    %46 = vector.shape_cast %45 : vector<1xf32> to vector<1x1xf32>
    %47 = tpu.iota {dimensions = array<i32: 1>} : vector<1x128xi32>
    %c0_i32 = arith.constant 0 : i32
    %48 = vector.broadcast %c0_i32 : i32 to vector<1x128xi32>
    %49 = arith.cmpi eq, %47, %48 : vector<1x128xi32>
    %c1_i32 = arith.constant 1 : i32
    %50 = vector.broadcast %c1_i32 : i32 to vector<1x128xi32>
    %51 = arith.cmpi eq, %47, %50 : vector<1x128xi32>
    %cst_12 = arith.constant 0.000000e+00 : f32
    %52 = vector.shape_cast %46 : vector<1x1xf32> to vector<1x1xf32>
    %53 = vector.broadcast %52 : vector<1x1xf32> to vector<1x128xf32>
    %54 = vector.broadcast %cst_12 : f32 to vector<1x128xf32>
    %55 = arith.select %51, %53, %54 : vector<1x128xi1>, vector<1x128xf32>
    %56 = vector.shape_cast %44 : vector<1x1xf32> to vector<1x1xf32>
    %57 = vector.broadcast %56 : vector<1x1xf32> to vector<1x128xf32>
    %58 = arith.select %49, %57, %55 : vector<1x128xi1>, vector<1x128xf32>
    %c0_13 = arith.constant 0 : index
    %c0_14 = arith.constant 0 : index
    %c0_15 = arith.constant 0 : index
    %59 = vector.load %arg3[%c0_13, %c0_14, %c0_15] : memref<1x1x128xf32, #tpu.memory_space<vmem>>, vector<1x1x128xf32>
    %60 = vector.shape_cast %59 : vector<1x1x128xf32> to vector<1x128xf32>
    %61 = vector.shape_cast %58 : vector<1x128xf32> to vector<1x1x128xf32>
    tpu.vector_store %arg3[%c0_13, %c0_14, %c0_15], %61 {strides = array<i32>} : memref<1x1x128xf32, #tpu.memory_space<vmem>>, vector<1x1x128xf32>,
    return
  }
  func.func @transform_0(%arg0: i32) -> (i32, i32) {
    %c0_i32 = arith.constant 0 : i32
    %c0_i32_0 = arith.constant 0 : i32
    return %c0_i32, %arg0 : i32, i32
  }
  func.func @transform_1(%arg0: i32) -> (i32, i32) {
    %c0_i32 = arith.constant 0 : i32
    %c0_i32_0 = arith.constant 0 : i32
    return %c0_i32, %arg0 : i32, i32
  }
  func.func @transform_2(%arg0: i32) -> (i32, i32, i32) {
    %c0_i32 = arith.constant 0 : i32
    %c0_i32_0 = arith.constant 0 : i32
    %c0_i32_1 = arith.constant 0 : i32
    return %arg0, %c0_i32, %c0_i32_0 : i32, i32, i32
  }
}

</mosaic_0001>

<llo_original>
// kernel: tpu_custom_call.1
$region0: #{tpu_custom_call.1}
  #allocation0 [shape = 'u32[]', space=smem, size = 0x4, offset = 0x4, fixed_abs, tag = 'smem constant byte address 0x4 - core index']
  #allocation1 [shape = 'u32[144,128]{1,0:T(1,128)}', space=vmem, size = 0x12000, scoped, tag = 'internal scratch']
  %s0 = inlined_call_operand.hbm [shape: f32[32,128], index: 0, kind: input, shape index: {}]
  %s1 = inlined_call_operand.vmem [shape: f32[1,128], index: 1, kind: input, shape index: {}]
  %s2 = inlined_call_operand.hbm [shape: f32[1,1,128], index: 2, kind: output, shape index: {}]
  %s3 = sld [smem:[#allocation0]]
  $region22: #{tpu_custom_call.1} parent=0
    _
  %s5 = ssub.s32 1, %s3
  %s6 = scalar_select 0, %s5, %s3
  $region1: #{tpu_custom_call.1} parent=0
    #allocation2 [shape = 'u8[16384]{0}', space=vmem, size = 0x4000, scoped, tag = 'input window, operand 0, single buffered']
    #allocation3 [shape = 's32[1]{0}', space=sflag, size = 0x4, scoped, tag = 'scoped memory for tpu_custom_call.1']
    #allocation4 [shape = 's32[1]{0}', space=sflag, size = 0x4, scoped, tag = 'scoped memory for tpu_custom_call.1']
    #allocation5 [shape = 'u8[512]{0}', space=vmem, size = 0x400, scoped, tag = 'output window, operand 0, single buffered']
    %7 = vsyncpa [#allocation3], 0
    %8 = vsyncpa [#allocation4], 0
    // Predicated region
    $region2: #{tpu_custom_call.1} parent=1 // pred_check
      _
    $region3: #{tpu_custom_call.1} parent=1 // pred_check_branch
      %10 = sbr.rel (0) target = $region5
    $region4: #{tpu_custom_call.1} parent=1 // pred_region
      %s12 = ssub.s32 512, 512
      %13 = vsyncadd [#allocation3], %s12
      %s14 = sshll.u32 [#allocation2], 4
      %s15 = int_to_ptr.vmem [resolvable:$true] %s14
      %20 = dma.hbm_to_vmem [thread:$0]  %s0, 512, %s15, [#allocation3], 128, 128, 8
    $region5: #{tpu_custom_call.1} parent=1 // pred_fallthru
      _
    // Predicated region
    $region6: #{tpu_custom_call.1} parent=1 // pred_check
      _
    $region7: #{tpu_custom_call.1} parent=1 // pred_check_branch
      %22 = sbr.rel (0) target = $region9
    $region8: #{tpu_custom_call.1} parent=1 // pred_region
      _
    $region9: #{tpu_custom_call.1} parent=1 // pred_fallthru
      _
    // Predicated region
    $region10: #{tpu_custom_call.1} parent=1 // pred_check
      _
    $region11: #{tpu_custom_call.1} parent=1 // pred_check_branch
      %24 = sbr.rel (0) target = $region13
    $region12: #{tpu_custom_call.1} parent=1 // pred_region
      %25 = dma.done [#allocation3], 512
    $region13: #{tpu_custom_call.1} parent=1 // pred_fallthru
      _
    %v26 = vld [vmem:[#allocation2] sm:$0xff]
    %v27 = vld [vmem:[#allocation2 + $0x8] sm:$0xff]
    %v28 = vld [vmem:[#allocation2 + $0x10] sm:$0xff]
    %v29 = vld [vmem:[#allocation2 + $0x18] sm:$0xff]
    %v30 = vld [vmem:[%s1] sm:$0x1]
    %v31 = vmax.f32 %v26, %v27
    %v32 = vmax.f32 %v28, %v29
    %v33 = vmax.f32 %v31, %v32
    %v34 = vrot.slane %v33, 4
    %v35 = vmax.f32 %v33, %v34
    %v36 = vrot.slane %v35, 2
    %v37 = vmax.f32 %v35, %v36
    %v38 = vrot.slane %v37, 1
    %v39 = vmax.f32 %v37, %v38
    %v40 = vsub.f32 %v26, %v39
    %v41 = vsub.f32 %v27, %v39
    %v42 = vsub.f32 %v28, %v39
    %v43 = vsub.f32 %v29, %v39
    %v44 = vmul.f32 %v40, 1.442695
    %v45 = vpow.pop %v44
    %v46 = vmul.f32 %v41, 1.442695
    %v47 = vpow.pop %v46
    %v48 = vmul.f32 %v42, 1.442695
    %v49 = vpow.pop %v48
    %v50 = vmul.f32 %v43, 1.442695
    %v51 = vpow.pop %v50
    %v52 = vadd.f32 %v45, %v47
    %v53 = vadd.f32 %v52, %v49
    %v54 = vadd.f32 %v53, %v51
    %v55 = vrot.slane %v54, 4
    %v56 = vadd.f32 %v54, %v55
    %v57 = vrot.slane %v56, 2
    %v58 = vadd.f32 %v56, %v57
    %v59 = vrot.slane %v58, 1
    %v60 = vadd.f32 %v58, %v59
    %v61 = vrcp.pop %v60
    %v62 = vmul.f32 %v45, %v61
    %v63 = vmul.f32 %v47, %v61
    %v64 = vmul.f32 %v49, %v61
    %v65 = vmul.f32 %v51, %v61
    %v66 = vlaneseq
    %v67 = vshrl.u32 %v66, 7
    %v68 = vadd.s32 %v67, 8
    %v69 = vadd.s32 %v67, 16
    %v70 = vadd.s32 %v67, 24
    %v71 = vcvt.s32.f32 %v67
    %v72 = vcvt.s32.f32 %v68
    %v73 = vcvt.s32.f32 %v69
    %v74 = vcvt.s32.f32 %v70
    %v75 = vsub.f32 %v71, 15.5
    %v76 = vsub.f32 %v72, 15.5
    %v77 = vsub.f32 %v73, 15.5
    %v78 = vsub.f32 %v74, 15.5
    %v79 = vmul.f32 %v62, %v75
    %v80 = vmul.f32 %v63, %v76
    %v81 = vmul.f32 %v64, %v77
    %v82 = vmul.f32 %v65, %v78
    %v83 = vadd.f32 %v79, %v80
    %v84 = vadd.f32 %v83, %v81
    %v85 = vadd.f32 %v84, %v82
    %v86 = vrot.slane %v85, 4
    %v87 = vadd.f32 %v85, %v86
    %v88 = vrot.slane %v87, 2
    %v89 = vadd.f32 %v87, %v88
    %v90 = vrot.slane %v89, 1
    %v91 = vadd.f32 %v89, %v90
    %v92 = vmul.f32 %v75, %v75
    %v93 = vmul.f32 %v76, %v76
    %v94 = vmul.f32 %v77, %v77
    %v95 = vmul.f32 %v78, %v78
    %v96 = vmul.f32 %v62, %v92
    %v97 = vmul.f32 %v63, %v93
    %v98 = vmul.f32 %v64, %v94
    %v99 = vmul.f32 %v65, %v95
    %v100 = vadd.f32 %v96, %v97
    %v101 = vadd.f32 %v100, %v98
    %v102 = vadd.f32 %v101, %v99
    %v103 = vrot.slane %v102, 4
    %v104 = vadd.f32 %v102, %v103
    %v105 = vrot.slane %v104, 2
    %v106 = vadd.f32 %v104, %v105
    %v107 = vrot.slane %v106, 1
    %v108 = vadd.f32 %v106, %v107
    %v109 = vmul.f32 %v91, %v91
    %v110 = vsub.f32 %v108, %v109
    %v111 = vadd.f32 %v91, 15.5
    %v112 = vsub.f32 %v111, %v30
    %v113 = vmul.f32 %v112, %v112
    %v114 = vrcp.pop %v110
    %v115 = vmul.f32 %v113, %v114
    %s116 = smul.u32 0, 128
    %v117 = vlaneseq
    %v118 = vand.u32 %v117, 127
    %v119 = vstv %s116
    %v120 = vadd.s32 %v119, %v118
    %vm121 = vcmp.lt.s32.totalorder %v120, 8
    %v122 = vsel %vm121, %v115, 0.0
    %v123 = vsel %vm121, %v110, 0.0
    %vm124 = vcmask 1040384
    %v125 = vsel %vm124, %v122, 0.0
    %126 = vadd.xlane.f32.xlu0 %v125
    %v127 = vpop.xlane.xlu0 %126
    %128 = vadd.xlane.f32.xlu0 %v123
    %v129 = vpop.xlane.xlu0 %128
    %vm130 = vcmp.eq.s32.totalorder %v118, 0
    %vm131 = vcmp.eq.s32.totalorder %v118, 1
    %v132 = vsel %vm131, %v129, 0.0
    %v133 = vsel %vm130, %v127, %v132
    %134 = vst [vmem:[#allocation5] sm:$0x1] %v133
    // Predicated region
    $region14: #{tpu_custom_call.1} parent=1 // pred_check
      _
    $region15: #{tpu_custom_call.1} parent=1 // pred_check_branch
      %136 = sbr.rel (0) target = $region17
    $region16: #{tpu_custom_call.1} parent=1 // pred_region
      %s138 = ssub.s32 16, 16
      %139 = vsyncadd [#allocation4], %s138
      %s141 = sshll.u32 [#allocation5], 4
      %s142 = int_to_ptr.vmem [resolvable:$true] %s141
      %144 = dma.vmem_to_hbm [thread:$0]  %s142, 16, %s2, [#allocation4]
    $region17: #{tpu_custom_call.1} parent=1 // pred_fallthru
      _
    // Predicated region
    $region18: #{tpu_custom_call.1} parent=1 // pred_check
      _
    $region19: #{tpu_custom_call.1} parent=1 // pred_check_branch
      %146 = sbr.rel (0) target = $region21
    $region20: #{tpu_custom_call.1} parent=1 // pred_region
      %147 = dma.done [#allocation4], 16
    $region21: #{tpu_custom_call.1} parent=1 // pred_fallthru
      _
    %148 = vsyncpa [#allocation3], 1
    %149 = vsyncpa [#allocation4], 1

</llo_original>
